<compile_context>
chip_gen: v7x
topology: tpu7x:2x2x1
jax: 0.10.0
libtpu: 0.0.40
codegen_flags: <defaults>
</compile_context>

<pallas_src>
import functools

import jax
import jax.numpy as jnp
from jax.experimental import pallas as pl
from jax.experimental.pallas import tpu as pltpu


def _rmsnorm_kernel(x_ref, g_ref, o_ref, *, scale, eps):
    x = x_ref[...]                                      # (tile, dim), native dtype
    xf = x.astype(jnp.float32)
    # torch.norm(x, dim=-1) * dim**-0.5, accumulated in f32.
    sumsq = jnp.sum(xf * xf, axis=-1, keepdims=True)    # (tile, 1) f32
    norm = jnp.sqrt(sumsq) * scale
    # clamp(min=eps) then invert once per row (cheap: (tile, 1) elements only);
    # the per-element work is then just two vmuls.
    inv = 1.0 / jnp.maximum(norm, eps)
    out = x * inv.astype(x.dtype) * g_ref[...]
    o_ref[...] = out.astype(o_ref.dtype)


def rmsnorm(x, g, eps=1e-8, *, tile_rows=512):
    """x: [..., dim], g: [dim]. Returns same shape/dtype as x."""
    orig_shape = x.shape
    dim = orig_shape[-1]
    scale = float(dim) ** -0.5

    x2 = x.reshape(-1, dim)
    rows = x2.shape[0]
    g2 = g.reshape(1, dim)

    # Pick the largest row tile that fits the VMEM budget:
    #   2x double-buffered input + 2x double-buffered output (native dtype)
    #   + ~1 f32 temporary per element.
    itemsize = jnp.dtype(x.dtype).itemsize
    budget_bytes = 40 * 1024 * 1024
    per_row_bytes = dim * (4 * itemsize + 4)
    tile = min(tile_rows, rows, max(8, budget_bytes // per_row_bytes))
    if tile < rows:
        tile = max(8, (tile // 8) * 8)  # sublane-aligned when not full-extent

    # No padding copies: ragged last block's OOB rows are garbage but their
    # stores are masked, and each row only feeds its own output row.
    grid = (pl.cdiv(rows, tile),)

    kernel = functools.partial(_rmsnorm_kernel, scale=scale, eps=eps)

    out = pl.pallas_call(
        kernel,
        out_shape=jax.ShapeDtypeStruct((rows, dim), x.dtype),
        grid_spec=pltpu.PrefetchScalarGridSpec(
            num_scalar_prefetch=0,
            grid=grid,
            in_specs=[
                pl.BlockSpec((tile, dim), lambda i: (i, 0)),
                pl.BlockSpec((1, dim), lambda i: (0, 0)),
            ],
            out_specs=pl.BlockSpec((tile, dim), lambda i: (i, 0)),
        ),
        compiler_params=pltpu.CompilerParams(
            dimension_semantics=("parallel",),       # row axis shards across TCs
            vmem_limit_bytes=48 * 1024 * 1024,       # fits v7x (64 MiB physical)
        ),
    )(x2, g2)

    return out.reshape(orig_shape)


if __name__ == "__main__":
    key = jax.random.PRNGKey(0)
    batch, seq, dim = 2, 8, 32

    x = jax.random.normal(key, (batch, seq, dim), dtype=jnp.float32)
    # nn.Parameter(torch.ones(dim)) -> deterministic ones init.
    g = jnp.ones((dim,), dtype=jnp.float32)

    out = jax.block_until_ready(rmsnorm(x, g))

    # Reference check (plain JAX).
    norm = jnp.linalg.norm(x, axis=-1, keepdims=True) * (dim ** -0.5)
    ref = x / jnp.maximum(norm, 1e-8) * g
    assert out.shape == x.shape and out.dtype == x.dtype
    assert jnp.allclose(out, ref, atol=1e-5, rtol=1e-5)

    print("KERNEL_OK")
</pallas_src>

<mosaic_0001>
module attributes {stable_mosaic.version = 11 : i64} {
  func.func @_rmsnorm_kernel(%arg0: i32, %arg1: memref<16x32xf32, #tpu.memory_space<vmem>>, %arg2: memref<1x32xf32, #tpu.memory_space<vmem>>, %arg3: memref<16x32xf32, #tpu.memory_space<vmem>>) attributes {dimension_semantics = [#tpu.dimension_semantics<parallel>], iteration_bounds = array<i64: 1>, scalar_prefetch = 0 : i64, scratch_operands = 0 : i64, tpu.core_type = #tpu.core_type<tc>, window_params = [{transform_indices = @transform_0, window_bounds = array<i64: 16, 32>}, {pipeline_mode = #tpu.pipeline_mode<synchronous>, transform_indices = @transform_1, window_bounds = array<i64: 1, 32>}, {transform_indices = @transform_2, window_bounds = array<i64: 16, 32>}]} {
    %c0 = arith.constant 0 : index
    %c0_0 = arith.constant 0 : index
    %0 = vector.load %arg1[%c0, %c0_0] : memref<16x32xf32, #tpu.memory_space<vmem>>, vector<16x32xf32>
    %1 = arith.mulf %0, %0 : vector<16x32xf32>
    %cst = arith.constant dense<0.000000e+00> : vector<16xf32>
    %2 = vector.multi_reduction <add>, %1, %cst [1] : vector<16x32xf32> to vector<16xf32>
    %3 = vector.shape_cast %2 : vector<16xf32> to vector<16x1xf32>
    %4 = math.sqrt %3 : vector<16x1xf32>
    %cst_1 = arith.constant 0.176776692 : f32
    %5 = vector.broadcast %cst_1 : f32 to vector<16x1xf32>
    %6 = arith.mulf %4, %5 : vector<16x1xf32>
    %cst_2 = arith.constant 9.99999993E-9 : f32
    %7 = vector.broadcast %cst_2 : f32 to vector<16x1xf32>
    %8 = arith.maximumf %6, %7 : vector<16x1xf32>
    %cst_3 = arith.constant 1.000000e+00 : f32
    %9 = vector.broadcast %cst_3 : f32 to vector<16x1xf32>
    %10 = arith.divf %9, %8 : vector<16x1xf32>
    %11 = vector.broadcast %10 : vector<16x1xf32> to vector<16x32xf32>
    %12 = arith.mulf %0, %11 : vector<16x32xf32>
    %c0_4 = arith.constant 0 : index
    %c0_5 = arith.constant 0 : index
    %13 = vector.load %arg2[%c0_4, %c0_5] : memref<1x32xf32, #tpu.memory_space<vmem>>, vector<1x32xf32>
    %14 = vector.broadcast %13 : vector<1x32xf32> to vector<16x32xf32>
    %15 = arith.mulf %12, %14 : vector<16x32xf32>
    %c0_6 = arith.constant 0 : index
    %c0_7 = arith.constant 0 : index
    %16 = vector.load %arg3[%c0_6, %c0_7] : memref<16x32xf32, #tpu.memory_space<vmem>>, vector<16x32xf32>
    tpu.vector_store %arg3[%c0_6, %c0_7], %15 {strides = array<i32>} : memref<16x32xf32, #tpu.memory_space<vmem>>, vector<16x32xf32>,
    return
  }
  func.func @transform_0(%arg0: i32) -> (i32, i32) {
    %c0_i32 = arith.constant 0 : i32
    %c0_i32_0 = arith.constant 0 : i32
    return %arg0, %c0_i32 : i32, i32
  }
  func.func @transform_1(%arg0: i32) -> (i32, i32) {
    %c0_i32 = arith.constant 0 : i32
    %c0_i32_0 = arith.constant 0 : i32
    %c0_i32_1 = arith.constant 0 : i32
    return %c0_i32, %c0_i32_0 : i32, i32
  }
  func.func @transform_2(%arg0: i32) -> (i32, i32) {
    %c0_i32 = arith.constant 0 : i32
    %c0_i32_0 = arith.constant 0 : i32
    return %arg0, %c0_i32 : i32, i32
  }
}

</mosaic_0001>

<llo_original>
// kernel: tpu_custom_call.1
$region0: #{tpu_custom_call.1}
  #allocation0 [shape = 'u32[]', space=smem, size = 0x4, offset = 0x4, fixed_abs, tag = 'smem constant byte address 0x4 - core index']
  #allocation1 [shape = 'u32[144,128]{1,0:T(1,128)}', space=vmem, size = 0x12000, scoped, tag = 'internal scratch']
  %s0 = inlined_call_operand.hbm [shape: f32[16,32], index: 0, kind: input, shape index: {}]
  %s1 = inlined_call_operand.vmem [shape: f32[1,32], index: 1, kind: input, shape index: {}]
  %s2 = inlined_call_operand.hbm [shape: f32[16,32], index: 2, kind: output, shape index: {}]
  %s3 = sld [smem:[#allocation0]]
  $region22: #{tpu_custom_call.1} parent=0
    _
  %s5 = ssub.s32 1, %s3
  %s6 = scalar_select 0, %s5, %s3
  $region1: #{tpu_custom_call.1} parent=0
    #allocation2 [shape = 'u8[8192]{0}', space=vmem, size = 0x2000, scoped, tag = 'input window, operand 0, single buffered']
    #allocation3 [shape = 's32[1]{0}', space=sflag, size = 0x4, scoped, tag = 'scoped memory for tpu_custom_call.1']
    #allocation4 [shape = 's32[1]{0}', space=sflag, size = 0x4, scoped, tag = 'scoped memory for tpu_custom_call.1']
    #allocation5 [shape = 'u8[8192]{0}', space=vmem, size = 0x2000, scoped, tag = 'output window, operand 0, single buffered']
    %7 = vsyncpa [#allocation3], 0
    %8 = vsyncpa [#allocation4], 0
    // Predicated region
    $region2: #{tpu_custom_call.1} parent=1 // pred_check
      _
    $region3: #{tpu_custom_call.1} parent=1 // pred_check_branch
      %10 = sbr.rel (0) target = $region5
    $region4: #{tpu_custom_call.1} parent=1 // pred_region
      %s12 = ssub.s32 256, 256
      %13 = vsyncadd [#allocation3], %s12
      %s14 = sshll.u32 [#allocation2], 4
      %s15 = int_to_ptr.vmem [resolvable:$true] %s14
      %20 = dma.hbm_to_vmem [thread:$0]  %s0, 256, %s15, [#allocation3], 128, 128, 8
    $region5: #{tpu_custom_call.1} parent=1 // pred_fallthru
      _
    // Predicated region
    $region6: #{tpu_custom_call.1} parent=1 // pred_check
      _
    $region7: #{tpu_custom_call.1} parent=1 // pred_check_branch
      %22 = sbr.rel (0) target = $region9
    $region8: #{tpu_custom_call.1} parent=1 // pred_region
      _
    $region9: #{tpu_custom_call.1} parent=1 // pred_fallthru
      _
    // Predicated region
    $region10: #{tpu_custom_call.1} parent=1 // pred_check
      _
    $region11: #{tpu_custom_call.1} parent=1 // pred_check_branch
      %24 = sbr.rel (0) target = $region13
    $region12: #{tpu_custom_call.1} parent=1 // pred_region
      %25 = dma.done [#allocation3], 256
    $region13: #{tpu_custom_call.1} parent=1 // pred_fallthru
      _
    %v26 = vld [vmem:[#allocation2] sm:$0xff]
    %v27 = vld [vmem:[#allocation2 + $0x8] sm:$0xff]
    %v28 = vmul.f32 %v26, %v26
    %v29 = vmul.f32 %v27, %v27
    %vm30 = vcmask 261120
    %v31 = vsel %vm30, %v28, 0.0
    %32 = vadd.xlane.f32.xlu0 %v31
    %v33 = vpop.xlane.xlu0 %32
    %v34 = vsel %vm30, %v29, 0.0
    %35 = vadd.xlane.f32.xlu0 %v34
    %v36 = vpop.xlane.xlu0 %35
    %v37 = vrsqrt.pop %v33
    %v38 = vmul.f32 %v33, %v37
    %vm39 = vcmp.eq.f32.partialorder %v33, inf
    %v40 = vsel %vm39, %v33, %v38
    %vm41 = vcmp.eq.f32.partialorder %v33, 0.0
    %v42 = vand.u32 %v33, 2147483648
    %v43 = vsel %vm41, %v42, %v40
    %v44 = vrsqrt.pop %v36
    %v45 = vmul.f32 %v36, %v44
    %vm46 = vcmp.eq.f32.partialorder %v36, inf
    %v47 = vsel %vm46, %v36, %v45
    %vm48 = vcmp.eq.f32.partialorder %v36, 0.0
    %v49 = vand.u32 %v36, 2147483648
    %v50 = vsel %vm48, %v49, %v47
    %v51 = vmul.f32 %v43, 0.17677669
    %v52 = vmul.f32 %v50, 0.17677669
    %v53 = vmax.f32 %v51, 1e-08
    %v54 = vmax.f32 %v52, 1e-08
    %v55 = vrcp.pop %v53
    %v56 = vmul.f32 1.0, %v55
    %v57 = vrcp.pop %v54
    %v58 = vmul.f32 1.0, %v57
    %v59 = vmul.f32 %v26, %v56
    %v60 = vmul.f32 %v27, %v58
    %v61 = vld [vmem:[%s1] sm:$0x1]
    %v63 = vlaneseq
    %v64 = vshrl.u32 %v63, 7
    %v65 = vsub.s32 0, %v64
    %v66 = vrot.slane %v61, %v65
    %v68 = vmul.f32 %v59, %v66
    %v69 = vmul.f32 %v60, %v66
    %70 = vst.msk [vmem:[#allocation5] sm:$0xff] %vm30, %v68
    %71 = vst.msk [vmem:[#allocation5 + $0x8] sm:$0xff] %vm30, %v69
    // Predicated region
    $region14: #{tpu_custom_call.1} parent=1 // pred_check
      _
    $region15: #{tpu_custom_call.1} parent=1 // pred_check_branch
      %73 = sbr.rel (0) target = $region17
    $region16: #{tpu_custom_call.1} parent=1 // pred_region
      %s75 = ssub.s32 256, 256
      %76 = vsyncadd [#allocation4], %s75
      %s77 = sshll.u32 [#allocation5], 4
      %s78 = int_to_ptr.vmem [resolvable:$true] %s77
      %83 = dma.vmem_to_hbm [thread:$0]  %s78, 256, %s2, [#allocation4], 128, 128, 8
    $region17: #{tpu_custom_call.1} parent=1 // pred_fallthru
      _
    // Predicated region
    $region18: #{tpu_custom_call.1} parent=1 // pred_check
      _
    $region19: #{tpu_custom_call.1} parent=1 // pred_check_branch
      %85 = sbr.rel (0) target = $region21
    $region20: #{tpu_custom_call.1} parent=1 // pred_region
      %86 = dma.done [#allocation4], 256
    $region21: #{tpu_custom_call.1} parent=1 // pred_fallthru
      _
    %87 = vsyncpa [#allocation3], 1
    %88 = vsyncpa [#allocation4], 1

</llo_original>
